<compile_context>
chip_gen: v6e
topology: v6e:2x2x1
jax: 0.10.0
libtpu: 0.0.40
codegen_flags: <defaults>
</compile_context>

<pallas_src>
import jax
import jax.numpy as jnp
from jax import lax
from jax.experimental import pallas as pl
from jax.experimental.pallas import tpu as pltpu


# ----------------------------- config (DeepseekV3 router, small) -------------
HIDDEN = 64            # config.hidden_size
N_EXPERTS = 16         # config.n_routed_experts
N_GROUP = 4            # config.n_group
TOPK_GROUP = 2         # config.topk_group
TOP_K = 4              # config.num_experts_per_tok
NORM_TOPK_PROB = True  # config.norm_topk_prob
ROUTED_SCALING = 2.5   # config.routed_scaling_factor
EXPERTS_PER_GROUP = N_EXPERTS // N_GROUP

BATCH, SEQ = 2, 8

# Tokens per grid step (multiple of 128 for lane-dense stores).  For the real
# DeepseekV3 config (H=7168, 256 experts, bf16 x): ~1024 on v6e, 512-1024 on
# v5e, <=512 on v7x (64 MiB VMEM); keep >=2 grid steps so the "parallel"
# token axis can shard across v7x's two TensorCores.
TOKEN_TILE = 512

# low bits of the packed top-k key hold the (inverted) expert index
_IDX_MASK = (1 << (N_EXPERTS - 1).bit_length()) - 1


def _sortable_bits(x):
    """Monotone f32 -> int32 key: x1 < x2  <=>  key(x1) < key(x2) (no NaNs)."""
    b = pltpu.bitcast(x, jnp.int32)
    return b ^ ((b >> 31) & jnp.int32(0x7FFFFFFF))


def _router_kernel(x_ref, w_ref, b_ref, idx_ref, wt_ref):
    """x_ref (T, H) bf16, w_ref (E, H) bf16, b_ref (E, 1) f32 -> (TOP_K, T)."""
    tb = x_ref.shape[0]
    neg_inf = jnp.float32(-jnp.inf)
    int_min = jnp.int32(jnp.iinfo(jnp.int32).min)

    # router_logits: (E, T), tokens on lanes.  bf16 operands / f32 accumulate;
    # Mosaic performs the x operand transpose in VMEM (no HBM transpose).
    logits = lax.dot_general(
        w_ref[...], x_ref[...],
        dimension_numbers=(((1,), (1,)), ((), ())),
        preferred_element_type=jnp.float32)

    scores = jax.nn.sigmoid(logits)                 # (E, T) un-biased
    s_choice = scores + b_ref[...]                  # + e_score_correction_bias

    # ---- per-group top-2 sum on static EPG-row sublane slices -> (G, T) -----
    lrow = lax.broadcasted_iota(jnp.int32, (EXPERTS_PER_GROUP, tb), 0)
    s_groups, g_rows = [], []
    for g in range(N_GROUP):
        sg = s_choice[g * EXPERTS_PER_GROUP:(g + 1) * EXPERTS_PER_GROUP, :]
        s_groups.append(sg)
        m1 = jnp.max(sg, axis=0, keepdims=True)
        i1 = jnp.min(jnp.where(sg == m1, lrow, EXPERTS_PER_GROUP),
                     axis=0, keepdims=True)
        m2 = jnp.max(jnp.where(lrow == i1, neg_inf, sg), axis=0, keepdims=True)
        g_rows.append(m1 + m2)
    gscores = jnp.concatenate(g_rows, axis=0)       # (G, T) workspace

    # ---- select top `topk_group` groups on the small (G, T) workspace -------
    grow = lax.broadcasted_iota(jnp.int32, (N_GROUP, tb), 0)
    work = gscores
    gsel = jnp.zeros((N_GROUP, tb), jnp.bool_)
    for _ in range(TOPK_GROUP):
        m = jnp.max(work, axis=0, keepdims=True)
        arg = jnp.min(jnp.where(work == m, grow, N_GROUP), axis=0, keepdims=True)
        hit = grow == arg
        gsel = jnp.logical_or(gsel, hit)
        work = jnp.where(hit, neg_inf, work)

    # masked_fill(~group_mask, 0.0) — expand the (G, T) mask per group slice
    masked = jnp.concatenate(
        [jnp.where(gsel[g:g + 1, :], s_groups[g], jnp.float32(0.0))
         for g in range(N_GROUP)], axis=0)          # (E, T)

    # ---- top-k experts: single packed-key argmax reduction per k ------------
    # key = monotone score bits with low bits replaced by the inverted expert
    # index: max() picks the highest score, exact ties break to the lowest
    # index, the one-hot (key == max) has exactly one hit, and the winning
    # expert id is recovered from the key without a second reduction.
    # (Selection precision is the score's top 32-log2(E) bits; immaterial for
    # routing and sanctioned by the perf review.)
    row = lax.broadcasted_iota(jnp.int32, (N_EXPERTS, tb), 0)
    key = (_sortable_bits(masked) & jnp.int32(~_IDX_MASK)) | (
        jnp.int32(N_EXPERTS - 1) - row)

    idx_rows, wt_rows = [], []
    for _ in range(TOP_K):
        m = jnp.max(key, axis=0, keepdims=True)                 # (1, T)
        onehot = key == m                                       # exactly one hit
        arg = jnp.int32(N_EXPERTS - 1) - (m & jnp.int32(_IDX_MASK))
        # gather routing weight from the *un-biased* sigmoid scores
        w_k = jnp.sum(jnp.where(onehot, scores, jnp.float32(0.0)),
                      axis=0, keepdims=True)
        idx_rows.append(arg)
        wt_rows.append(w_k)
        key = jnp.where(onehot, int_min, key)

    idx = jnp.concatenate(idx_rows, axis=0)         # (TOP_K, T) int32
    wts = jnp.concatenate(wt_rows, axis=0)          # (TOP_K, T) f32

    if NORM_TOPK_PROB:
        wts = wts / (jnp.sum(wts, axis=0, keepdims=True) + 1e-20)
    wts = wts * jnp.float32(ROUTED_SCALING)

    idx_ref[...] = idx      # lane-dense (TOP_K, T): unmasked stores
    wt_ref[...] = wts


def deepseek_v3_topk_router(hidden_states, weight, e_score_correction_bias,
                            token_tile=TOKEN_TILE, compute_dtype=jnp.bfloat16):
    """hidden_states (B,S,H); weight (E,H); bias (E,) -> (topk_idx, topk_w).

    The PyTorch module upcasts to f32 for the linear; per perf guidance we use
    bf16 operands with f32 accumulation (pass compute_dtype=jnp.float32 to
    reproduce the full-f32 path).
    """
    h = hidden_states.shape[-1]
    x = hidden_states.reshape(-1, h).astype(compute_dtype)   # cast before pad: half the bytes
    w = weight.astype(compute_dtype)
    t = x.shape[0]

    tile = min(token_tile, ((t + 127) // 128) * 128)          # lane-dense, low pad waste
    t_pad = ((t + tile - 1) // tile) * tile
    if t_pad != t:
        x = jnp.pad(x, ((0, t_pad - t), (0, 0)))

    bias2d = e_score_correction_bias.reshape(N_EXPERTS, 1).astype(jnp.float32)

    # scoped-VMEM limit: ~3/4 of physical (~96 MiB v5e/v6e, ~48 MiB v7x)
    try:
        vmem_cap = int(getattr(pltpu.get_tpu_info(), "vmem_capacity_bytes",
                               128 * 1024 * 1024))
    except Exception:
        vmem_cap = 128 * 1024 * 1024
    vmem_limit = int(max(32 * 1024 * 1024, (vmem_cap * 3) // 4))

    itemsize = jnp.dtype(compute_dtype).itemsize
    cost = pl.CostEstimate(
        flops=2 * t_pad * h * N_EXPERTS,
        transcendentals=t_pad * N_EXPERTS,
        bytes_accessed=(t_pad * h * itemsize + N_EXPERTS * h * itemsize
                        + N_EXPERTS * 4 + 2 * TOP_K * t_pad * 4))

    grid = (t_pad // tile,)
    # TODO(synk): single-buffer the resident weight/bias blocks with
    # pipeline_mode=pl.Buffered(1) once confirmed supported on the top-level
    # TPU pallas_call pipeline (saves one weight-sized buffer on v7x's 64 MiB).
    idx_t, wts_t = pl.pallas_call(
        _router_kernel,
        out_shape=(
            jax.ShapeDtypeStruct((TOP_K, t_pad), jnp.int32),
            jax.ShapeDtypeStruct((TOP_K, t_pad), jnp.float32),
        ),
        grid_spec=pltpu.PrefetchScalarGridSpec(
            num_scalar_prefetch=0,
            grid=grid,
            in_specs=[
                pl.BlockSpec((tile, h), lambda i: (i, 0)),
                # constant index maps keep the small weight/bias blocks
                # resident across grid steps (no re-DMA per step)
                pl.BlockSpec((N_EXPERTS, h), lambda i: (0, 0)),
                pl.BlockSpec((N_EXPERTS, 1), lambda i: (0, 0)),
            ],
            out_specs=[
                pl.BlockSpec((TOP_K, tile), lambda i: (0, i)),
                pl.BlockSpec((TOP_K, tile), lambda i: (0, i)),
            ],
        ),
        compiler_params=pltpu.CompilerParams(
            dimension_semantics=("parallel",),
            vmem_limit_bytes=vmem_limit),
        cost_estimate=cost,
    )(x, w, bias2d)

    # back to (tokens, TOP_K) and drop padding (tiny TOP_K x tokens plumbing)
    return idx_t.T[:t], wts_t.T[:t]


# ----------------------------- pure-JAX reference ----------------------------
def _reference(hidden_states, weight, bias, compute_dtype=jnp.bfloat16):
    x = hidden_states.reshape(-1, HIDDEN).astype(compute_dtype)
    w = weight.astype(compute_dtype)
    logits = lax.dot_general(w, x, dimension_numbers=(((1,), (1,)), ((), ())),
                             preferred_element_type=jnp.float32).T  # (T, E)
    scores = jax.nn.sigmoid(logits)
    sfc = scores + bias[None, :].astype(jnp.float32)
    t = sfc.shape[0]
    gs = sfc.reshape(t, N_GROUP, EXPERTS_PER_GROUP)
    group_scores = lax.top_k(gs, 2)[0].sum(-1)                       # (t, G)
    gidx = lax.top_k(group_scores, TOPK_GROUP)[1]                    # (t, topk_group)
    gmask = jnp.zeros((t, N_GROUP)).at[jnp.arange(t)[:, None], gidx].set(1.0)
    smask = jnp.repeat(gmask, EXPERTS_PER_GROUP, axis=-1).astype(bool)
    sfc_m = jnp.where(smask, sfc, 0.0)
    tidx = lax.top_k(sfc_m, TOP_K)[1]
    tw = jnp.take_along_axis(scores, tidx, axis=1)
    if NORM_TOPK_PROB:
        tw = tw / (tw.sum(-1, keepdims=True) + 1e-20)
    tw = tw * ROUTED_SCALING
    return tidx, tw


def _sort_by_index(idx, wt):
    order = jnp.argsort(idx, axis=-1)
    return (jnp.take_along_axis(idx, order, axis=-1),
            jnp.take_along_axis(wt, order, axis=-1))


if __name__ == "__main__":
    key = jax.random.PRNGKey(0)
    k_x, k_w, k_b = jax.random.split(key, 3)

    hidden_states = jax.random.normal(k_x, (BATCH, SEQ, HIDDEN), dtype=jnp.float32)
    # nn.Parameter(torch.empty(E, H)) — deterministic synthetic init (scale
    # chosen so router scores are well spread, as in a trained router)
    weight = jax.random.normal(k_w, (N_EXPERTS, HIDDEN), dtype=jnp.float32) * 0.15
    # registered buffer (zeros in __init__); small values to exercise the path
    e_score_correction_bias = (
        jax.random.normal(k_b, (N_EXPERTS,), dtype=jnp.float32) * 0.02)

    idx, wts = deepseek_v3_topk_router(hidden_states, weight, e_score_correction_bias)
    jax.block_until_ready((idx, wts))

    ref_idx, ref_wts = _reference(hidden_states, weight, e_score_correction_bias)
    ki, kw = _sort_by_index(idx, wts)
    ri, rw = _sort_by_index(ref_idx, ref_wts)

    assert bool(jnp.all(ki == ri)), "top-k index mismatch vs reference"
    assert bool(jnp.allclose(kw, rw, atol=1e-4, rtol=1e-4)), "top-k weight mismatch vs reference"

    print("KERNEL_OK")
</pallas_src>

<mosaic_0001>
module attributes {stable_mosaic.version = 11 : i64} {
  func.func @_router_kernel(%arg0: i32, %arg1: memref<128x64xbf16, #tpu.memory_space<vmem>>, %arg2: memref<16x64xbf16, #tpu.memory_space<vmem>>, %arg3: memref<16x1xf32, #tpu.memory_space<vmem>>, %arg4: memref<4x128xi32, #tpu.memory_space<vmem>>, %arg5: memref<4x128xf32, #tpu.memory_space<vmem>>) attributes {dimension_semantics = [#tpu.dimension_semantics<parallel>], iteration_bounds = array<i64: 1>, scalar_prefetch = 0 : i64, scratch_operands = 0 : i64, tpu.core_type = #tpu.core_type<tc>, window_params = [{transform_indices = @transform_0, window_bounds = array<i64: 128, 64>}, {pipeline_mode = #tpu.pipeline_mode<synchronous>, transform_indices = @transform_1, window_bounds = array<i64: 16, 64>}, {pipeline_mode = #tpu.pipeline_mode<synchronous>, transform_indices = @transform_2, window_bounds = array<i64: 16, 1>}, {transform_indices = @transform_3, window_bounds = array<i64: 4, 128>}, {transform_indices = @transform_4, window_bounds = array<i64: 4, 128>}]} {
    %c0 = arith.constant 0 : index
    %c0_0 = arith.constant 0 : index
    %0 = vector.load %arg2[%c0, %c0_0] : memref<16x64xbf16, #tpu.memory_space<vmem>>, vector<16x64xbf16>
    %c0_1 = arith.constant 0 : index
    %c0_2 = arith.constant 0 : index
    %1 = vector.load %arg1[%c0_1, %c0_2] : memref<128x64xbf16, #tpu.memory_space<vmem>>, vector<128x64xbf16>
    %cst = arith.constant dense<0.000000e+00> : vector<16x128xf32>
    %2 = tpu.matmul %0, %1, %cst {dimension_numbers = #tpu.dot_dimension_numbers<[1], [1], [0], [0], [0, 0, 1, 0], [], []>} : vector<16x64xbf16>, vector<128x64xbf16>, vector<16x128xf32> -> vector<16x128xf32>
    %3 = arith.negf %2 : vector<16x128xf32>
    %4 = math.exp %3 : vector<16x128xf32>
    %cst_3 = arith.constant 1.000000e+00 : f32
    %5 = vector.broadcast %cst_3 : f32 to vector<16x128xf32>
    %6 = arith.addf %5, %4 : vector<16x128xf32>
    %7 = arith.divf %5, %6 : vector<16x128xf32>
    %c0_4 = arith.constant 0 : index
    %c0_5 = arith.constant 0 : index
    %8 = vector.load %arg3[%c0_4, %c0_5] : memref<16x1xf32, #tpu.memory_space<vmem>>, vector<16x1xf32>
    %9 = vector.broadcast %8 : vector<16x1xf32> to vector<16x128xf32>
    %10 = arith.addf %7, %9 : vector<16x128xf32>
    %11 = tpu.iota {dimensions = array<i32: 0>} : vector<4x128xi32>
    %12 = vector.extract_strided_slice %10 {offsets = [0, 0], sizes = [4, 128], strides = [1, 1]} : vector<16x128xf32> to vector<4x128xf32>
    %cst_6 = arith.constant dense<0xFF800000> : vector<128xf32>
    %13 = vector.multi_reduction <maximumf>, %12, %cst_6 [0] : vector<4x128xf32> to vector<128xf32>
    %14 = vector.shape_cast %13 : vector<128xf32> to vector<1x128xf32>
    %15 = vector.broadcast %14 : vector<1x128xf32> to vector<4x128xf32>
    %16 = arith.cmpf oeq, %12, %15 : vector<4x128xf32>
    %c4_i32 = arith.constant 4 : i32
    %17 = vector.broadcast %c4_i32 : i32 to vector<4x128xi32>
    %18 = arith.select %16, %11, %17 : vector<4x128xi1>, vector<4x128xi32>
    %cst_7 = arith.constant dense<2147483647> : vector<128xi32>
    %19 = vector.multi_reduction <minsi>, %18, %cst_7 [0] : vector<4x128xi32> to vector<128xi32>
    %20 = vector.shape_cast %19 : vector<128xi32> to vector<1x128xi32>
    %21 = vector.broadcast %20 : vector<1x128xi32> to vector<4x128xi32>
    %22 = arith.cmpi eq, %11, %21 : vector<4x128xi32>
    %cst_8 = arith.constant 0xFF800000 : f32
    %23 = vector.broadcast %cst_8 : f32 to vector<4x128xf32>
    %24 = arith.select %22, %23, %12 : vector<4x128xi1>, vector<4x128xf32>
    %cst_9 = arith.constant dense<0xFF800000> : vector<128xf32>
    %25 = vector.multi_reduction <maximumf>, %24, %cst_9 [0] : vector<4x128xf32> to vector<128xf32>
    %26 = vector.shape_cast %25 : vector<128xf32> to vector<1x128xf32>
    %27 = arith.addf %14, %26 : vector<1x128xf32>
    %28 = vector.extract_strided_slice %10 {offsets = [4, 0], sizes = [4, 128], strides = [1, 1]} : vector<16x128xf32> to vector<4x128xf32>
    %cst_10 = arith.constant dense<0xFF800000> : vector<128xf32>
    %29 = vector.multi_reduction <maximumf>, %28, %cst_10 [0] : vector<4x128xf32> to vector<128xf32>
    %30 = vector.shape_cast %29 : vector<128xf32> to vector<1x128xf32>
    %31 = vector.broadcast %30 : vector<1x128xf32> to vector<4x128xf32>
    %32 = arith.cmpf oeq, %28, %31 : vector<4x128xf32>
    %c4_i32_11 = arith.constant 4 : i32
    %33 = vector.broadcast %c4_i32_11 : i32 to vector<4x128xi32>
    %34 = arith.select %32, %11, %33 : vector<4x128xi1>, vector<4x128xi32>
    %cst_12 = arith.constant dense<2147483647> : vector<128xi32>
    %35 = vector.multi_reduction <minsi>, %34, %cst_12 [0] : vector<4x128xi32> to vector<128xi32>
    %36 = vector.shape_cast %35 : vector<128xi32> to vector<1x128xi32>
    %37 = vector.broadcast %36 : vector<1x128xi32> to vector<4x128xi32>
    %38 = arith.cmpi eq, %11, %37 : vector<4x128xi32>
    %cst_13 = arith.constant 0xFF800000 : f32
    %39 = vector.broadcast %cst_13 : f32 to vector<4x128xf32>
    %40 = arith.select %38, %39, %28 : vector<4x128xi1>, vector<4x128xf32>
    %cst_14 = arith.constant dense<0xFF800000> : vector<128xf32>
    %41 = vector.multi_reduction <maximumf>, %40, %cst_14 [0] : vector<4x128xf32> to vector<128xf32>
    %42 = vector.shape_cast %41 : vector<128xf32> to vector<1x128xf32>
    %43 = arith.addf %30, %42 : vector<1x128xf32>
    %44 = vector.extract_strided_slice %10 {offsets = [8, 0], sizes = [4, 128], strides = [1, 1]} : vector<16x128xf32> to vector<4x128xf32>
    %cst_15 = arith.constant dense<0xFF800000> : vector<128xf32>
    %45 = vector.multi_reduction <maximumf>, %44, %cst_15 [0] : vector<4x128xf32> to vector<128xf32>
    %46 = vector.shape_cast %45 : vector<128xf32> to vector<1x128xf32>
    %47 = vector.broadcast %46 : vector<1x128xf32> to vector<4x128xf32>
    %48 = arith.cmpf oeq, %44, %47 : vector<4x128xf32>
    %c4_i32_16 = arith.constant 4 : i32
    %49 = vector.broadcast %c4_i32_16 : i32 to vector<4x128xi32>
    %50 = arith.select %48, %11, %49 : vector<4x128xi1>, vector<4x128xi32>
    %cst_17 = arith.constant dense<2147483647> : vector<128xi32>
    %51 = vector.multi_reduction <minsi>, %50, %cst_17 [0] : vector<4x128xi32> to vector<128xi32>
    %52 = vector.shape_cast %51 : vector<128xi32> to vector<1x128xi32>
    %53 = vector.broadcast %52 : vector<1x128xi32> to vector<4x128xi32>
    %54 = arith.cmpi eq, %11, %53 : vector<4x128xi32>
    %cst_18 = arith.constant 0xFF800000 : f32
    %55 = vector.broadcast %cst_18 : f32 to vector<4x128xf32>
    %56 = arith.select %54, %55, %44 : vector<4x128xi1>, vector<4x128xf32>
    %cst_19 = arith.constant dense<0xFF800000> : vector<128xf32>
    %57 = vector.multi_reduction <maximumf>, %56, %cst_19 [0] : vector<4x128xf32> to vector<128xf32>
    %58 = vector.shape_cast %57 : vector<128xf32> to vector<1x128xf32>
    %59 = arith.addf %46, %58 : vector<1x128xf32>
    %60 = vector.extract_strided_slice %10 {offsets = [12, 0], sizes = [4, 128], strides = [1, 1]} : vector<16x128xf32> to vector<4x128xf32>
    %cst_20 = arith.constant dense<0xFF800000> : vector<128xf32>
    %61 = vector.multi_reduction <maximumf>, %60, %cst_20 [0] : vector<4x128xf32> to vector<128xf32>
    %62 = vector.shape_cast %61 : vector<128xf32> to vector<1x128xf32>
    %63 = vector.broadcast %62 : vector<1x128xf32> to vector<4x128xf32>
    %64 = arith.cmpf oeq, %60, %63 : vector<4x128xf32>
    %c4_i32_21 = arith.constant 4 : i32
    %65 = vector.broadcast %c4_i32_21 : i32 to vector<4x128xi32>
    %66 = arith.select %64, %11, %65 : vector<4x128xi1>, vector<4x128xi32>
    %cst_22 = arith.constant dense<2147483647> : vector<128xi32>
    %67 = vector.multi_reduction <minsi>, %66, %cst_22 [0] : vector<4x128xi32> to vector<128xi32>
    %68 = vector.shape_cast %67 : vector<128xi32> to vector<1x128xi32>
    %69 = vector.broadcast %68 : vector<1x128xi32> to vector<4x128xi32>
    %70 = arith.cmpi eq, %11, %69 : vector<4x128xi32>
    %cst_23 = arith.constant 0xFF800000 : f32
    %71 = vector.broadcast %cst_23 : f32 to vector<4x128xf32>
    %72 = arith.select %70, %71, %60 : vector<4x128xi1>, vector<4x128xf32>
    %cst_24 = arith.constant dense<0xFF800000> : vector<128xf32>
    %73 = vector.multi_reduction <maximumf>, %72, %cst_24 [0] : vector<4x128xf32> to vector<128xf32>
    %74 = vector.shape_cast %73 : vector<128xf32> to vector<1x128xf32>
    %75 = arith.addf %62, %74 : vector<1x128xf32>
    %76 = tpu.concatenate %27, %43, %59, %75 in 0 : vector<1x128xf32>, vector<1x128xf32>, vector<1x128xf32>, vector<1x128xf32> -> vector<4x128xf32>
    %77 = tpu.iota {dimensions = array<i32: 0>} : vector<4x128xi32>
    %false = arith.constant false
    %78 = vector.broadcast %false : i1 to vector<4x128xi1>
    %cst_25 = arith.constant dense<0xFF800000> : vector<128xf32>
    %79 = vector.multi_reduction <maximumf>, %76, %cst_25 [0] : vector<4x128xf32> to vector<128xf32>
    %80 = vector.shape_cast %79 : vector<128xf32> to vector<1x128xf32>
    %81 = vector.broadcast %80 : vector<1x128xf32> to vector<4x128xf32>
    %82 = arith.cmpf oeq, %76, %81 : vector<4x128xf32>
    %c4_i32_26 = arith.constant 4 : i32
    %83 = vector.broadcast %c4_i32_26 : i32 to vector<4x128xi32>
    %84 = arith.select %82, %77, %83 : vector<4x128xi1>, vector<4x128xi32>
    %cst_27 = arith.constant dense<2147483647> : vector<128xi32>
    %85 = vector.multi_reduction <minsi>, %84, %cst_27 [0] : vector<4x128xi32> to vector<128xi32>
    %86 = vector.shape_cast %85 : vector<128xi32> to vector<1x128xi32>
    %87 = vector.broadcast %86 : vector<1x128xi32> to vector<4x128xi32>
    %88 = arith.cmpi eq, %77, %87 : vector<4x128xi32>
    %89 = arith.ori %78, %88 : vector<4x128xi1>
    %cst_28 = arith.constant 0xFF800000 : f32
    %90 = vector.broadcast %cst_28 : f32 to vector<4x128xf32>
    %91 = arith.select %88, %90, %76 : vector<4x128xi1>, vector<4x128xf32>
    %cst_29 = arith.constant dense<0xFF800000> : vector<128xf32>
    %92 = vector.multi_reduction <maximumf>, %91, %cst_29 [0] : vector<4x128xf32> to vector<128xf32>
    %93 = vector.shape_cast %92 : vector<128xf32> to vector<1x128xf32>
    %94 = vector.broadcast %93 : vector<1x128xf32> to vector<4x128xf32>
    %95 = arith.cmpf oeq, %91, %94 : vector<4x128xf32>
    %c4_i32_30 = arith.constant 4 : i32
    %96 = vector.broadcast %c4_i32_30 : i32 to vector<4x128xi32>
    %97 = arith.select %95, %77, %96 : vector<4x128xi1>, vector<4x128xi32>
    %cst_31 = arith.constant dense<2147483647> : vector<128xi32>
    %98 = vector.multi_reduction <minsi>, %97, %cst_31 [0] : vector<4x128xi32> to vector<128xi32>
    %99 = vector.shape_cast %98 : vector<128xi32> to vector<1x128xi32>
    %100 = vector.broadcast %99 : vector<1x128xi32> to vector<4x128xi32>
    %101 = arith.cmpi eq, %77, %100 : vector<4x128xi32>
    %102 = arith.ori %89, %101 : vector<4x128xi1>
    %103 = vector.extract_strided_slice %102 {offsets = [0, 0], sizes = [1, 128], strides = [1, 1]} : vector<4x128xi1> to vector<1x128xi1>
    %cst_32 = arith.constant 0.000000e+00 : f32
    %104 = vector.shape_cast %103 : vector<1x128xi1> to vector<1x128xi1>
    %105 = vector.broadcast %104 : vector<1x128xi1> to vector<4x128xi1>
    %106 = vector.broadcast %cst_32 : f32 to vector<4x128xf32>
    %107 = arith.select %105, %12, %106 : vector<4x128xi1>, vector<4x128xf32>
    %108 = vector.extract_strided_slice %102 {offsets = [1, 0], sizes = [1, 128], strides = [1, 1]} : vector<4x128xi1> to vector<1x128xi1>
    %cst_33 = arith.constant 0.000000e+00 : f32
    %109 = vector.shape_cast %108 : vector<1x128xi1> to vector<1x128xi1>
    %110 = vector.broadcast %109 : vector<1x128xi1> to vector<4x128xi1>
    %111 = vector.broadcast %cst_33 : f32 to vector<4x128xf32>
    %112 = arith.select %110, %28, %111 : vector<4x128xi1>, vector<4x128xf32>
    %113 = vector.extract_strided_slice %102 {offsets = [2, 0], sizes = [1, 128], strides = [1, 1]} : vector<4x128xi1> to vector<1x128xi1>
    %cst_34 = arith.constant 0.000000e+00 : f32
    %114 = vector.shape_cast %113 : vector<1x128xi1> to vector<1x128xi1>
    %115 = vector.broadcast %114 : vector<1x128xi1> to vector<4x128xi1>
    %116 = vector.broadcast %cst_34 : f32 to vector<4x128xf32>
    %117 = arith.select %115, %44, %116 : vector<4x128xi1>, vector<4x128xf32>
    %118 = vector.extract_strided_slice %102 {offsets = [3, 0], sizes = [1, 128], strides = [1, 1]} : vector<4x128xi1> to vector<1x128xi1>
    %cst_35 = arith.constant 0.000000e+00 : f32
    %119 = vector.shape_cast %118 : vector<1x128xi1> to vector<1x128xi1>
    %120 = vector.broadcast %119 : vector<1x128xi1> to vector<4x128xi1>
    %121 = vector.broadcast %cst_35 : f32 to vector<4x128xf32>
    %122 = arith.select %120, %60, %121 : vector<4x128xi1>, vector<4x128xf32>
    %123 = tpu.concatenate %107, %112, %117, %122 in 0 : vector<4x128xf32>, vector<4x128xf32>, vector<4x128xf32>, vector<4x128xf32> -> vector<16x128xf32>
    %124 = tpu.iota {dimensions = array<i32: 0>} : vector<16x128xi32>
    %125 = tpu.bitcast %123 : vector<16x128xf32> -> vector<16x128xi32>
    %c31_i32 = arith.constant 31 : i32
    %126 = vector.broadcast %c31_i32 : i32 to vector<16x128xi32>
    %127 = arith.shrsi %125, %126 : vector<16x128xi32>
    %c2147483647_i32 = arith.constant 2147483647 : i32
    %128 = vector.broadcast %c2147483647_i32 : i32 to vector<16x128xi32>
    %129 = arith.andi %127, %128 : vector<16x128xi32>
    %130 = arith.xori %125, %129 : vector<16x128xi32>
    %c-16_i32 = arith.constant -16 : i32
    %131 = vector.broadcast %c-16_i32 : i32 to vector<16x128xi32>
    %132 = arith.andi %130, %131 : vector<16x128xi32>
    %c15_i32 = arith.constant 15 : i32
    %133 = vector.broadcast %c15_i32 : i32 to vector<16x128xi32>
    %134 = arith.subi %133, %124 : vector<16x128xi32>
    %135 = arith.ori %132, %134 : vector<16x128xi32>
    %cst_36 = arith.constant dense<-2147483648> : vector<128xi32>
    %136 = vector.multi_reduction <maxsi>, %135, %cst_36 [0] : vector<16x128xi32> to vector<128xi32>
    %137 = vector.shape_cast %136 : vector<128xi32> to vector<1x128xi32>
    %138 = vector.broadcast %137 : vector<1x128xi32> to vector<16x128xi32>
    %139 = arith.cmpi eq, %135, %138 : vector<16x128xi32>
    %c15_i32_37 = arith.constant 15 : i32
    %140 = vector.broadcast %c15_i32_37 : i32 to vector<1x128xi32>
    %141 = arith.andi %137, %140 : vector<1x128xi32>
    %c15_i32_38 = arith.constant 15 : i32
    %142 = vector.broadcast %c15_i32_38 : i32 to vector<1x128xi32>
    %143 = arith.subi %142, %141 : vector<1x128xi32>
    %cst_39 = arith.constant 0.000000e+00 : f32
    %144 = vector.broadcast %cst_39 : f32 to vector<16x128xf32>
    %145 = arith.select %139, %7, %144 : vector<16x128xi1>, vector<16x128xf32>
    %cst_40 = arith.constant dense<0.000000e+00> : vector<128xf32>
    %146 = vector.multi_reduction <add>, %145, %cst_40 [0] : vector<16x128xf32> to vector<128xf32>
    %147 = vector.shape_cast %146 : vector<128xf32> to vector<1x128xf32>
    %c-2147483648_i32 = arith.constant -2147483648 : i32
    %148 = vector.broadcast %c-2147483648_i32 : i32 to vector<16x128xi32>
    %149 = arith.select %139, %148, %135 : vector<16x128xi1>, vector<16x128xi32>
    %cst_41 = arith.constant dense<-2147483648> : vector<128xi32>
    %150 = vector.multi_reduction <maxsi>, %149, %cst_41 [0] : vector<16x128xi32> to vector<128xi32>
    %151 = vector.shape_cast %150 : vector<128xi32> to vector<1x128xi32>
    %152 = vector.broadcast %151 : vector<1x128xi32> to vector<16x128xi32>
    %153 = arith.cmpi eq, %149, %152 : vector<16x128xi32>
    %c15_i32_42 = arith.constant 15 : i32
    %154 = vector.broadcast %c15_i32_42 : i32 to vector<1x128xi32>
    %155 = arith.andi %151, %154 : vector<1x128xi32>
    %c15_i32_43 = arith.constant 15 : i32
    %156 = vector.broadcast %c15_i32_43 : i32 to vector<1x128xi32>
    %157 = arith.subi %156, %155 : vector<1x128xi32>
    %cst_44 = arith.constant 0.000000e+00 : f32
    %158 = vector.broadcast %cst_44 : f32 to vector<16x128xf32>
    %159 = arith.select %153, %7, %158 : vector<16x128xi1>, vector<16x128xf32>
    %cst_45 = arith.constant dense<0.000000e+00> : vector<128xf32>
    %160 = vector.multi_reduction <add>, %159, %cst_45 [0] : vector<16x128xf32> to vector<128xf32>
    %161 = vector.shape_cast %160 : vector<128xf32> to vector<1x128xf32>
    %c-2147483648_i32_46 = arith.constant -2147483648 : i32
    %162 = vector.broadcast %c-2147483648_i32_46 : i32 to vector<16x128xi32>
    %163 = arith.select %153, %162, %149 : vector<16x128xi1>, vector<16x128xi32>
    %cst_47 = arith.constant dense<-2147483648> : vector<128xi32>
    %164 = vector.multi_reduction <maxsi>, %163, %cst_47 [0] : vector<16x128xi32> to vector<128xi32>
    %165 = vector.shape_cast %164 : vector<128xi32> to vector<1x128xi32>
    %166 = vector.broadcast %165 : vector<1x128xi32> to vector<16x128xi32>
    %167 = arith.cmpi eq, %163, %166 : vector<16x128xi32>
    %c15_i32_48 = arith.constant 15 : i32
    %168 = vector.broadcast %c15_i32_48 : i32 to vector<1x128xi32>
    %169 = arith.andi %165, %168 : vector<1x128xi32>
    %c15_i32_49 = arith.constant 15 : i32
    %170 = vector.broadcast %c15_i32_49 : i32 to vector<1x128xi32>
    %171 = arith.subi %170, %169 : vector<1x128xi32>
    %cst_50 = arith.constant 0.000000e+00 : f32
    %172 = vector.broadcast %cst_50 : f32 to vector<16x128xf32>
    %173 = arith.select %167, %7, %172 : vector<16x128xi1>, vector<16x128xf32>
    %cst_51 = arith.constant dense<0.000000e+00> : vector<128xf32>
    %174 = vector.multi_reduction <add>, %173, %cst_51 [0] : vector<16x128xf32> to vector<128xf32>
    %175 = vector.shape_cast %174 : vector<128xf32> to vector<1x128xf32>
    %c-2147483648_i32_52 = arith.constant -2147483648 : i32
    %176 = vector.broadcast %c-2147483648_i32_52 : i32 to vector<16x128xi32>
    %177 = arith.select %167, %176, %163 : vector<16x128xi1>, vector<16x128xi32>
    %cst_53 = arith.constant dense<-2147483648> : vector<128xi32>
    %178 = vector.multi_reduction <maxsi>, %177, %cst_53 [0] : vector<16x128xi32> to vector<128xi32>
    %179 = vector.shape_cast %178 : vector<128xi32> to vector<1x128xi32>
    %180 = vector.broadcast %179 : vector<1x128xi32> to vector<16x128xi32>
    %181 = arith.cmpi eq, %177, %180 : vector<16x128xi32>
    %c15_i32_54 = arith.constant 15 : i32
    %182 = vector.broadcast %c15_i32_54 : i32 to vector<1x128xi32>
    %183 = arith.andi %179, %182 : vector<1x128xi32>
    %c15_i32_55 = arith.constant 15 : i32
    %184 = vector.broadcast %c15_i32_55 : i32 to vector<1x128xi32>
    %185 = arith.subi %184, %183 : vector<1x128xi32>
    %cst_56 = arith.constant 0.000000e+00 : f32
    %186 = vector.broadcast %cst_56 : f32 to vector<16x128xf32>
    %187 = arith.select %181, %7, %186 : vector<16x128xi1>, vector<16x128xf32>
    %cst_57 = arith.constant dense<0.000000e+00> : vector<128xf32>
    %188 = vector.multi_reduction <add>, %187, %cst_57 [0] : vector<16x128xf32> to vector<128xf32>
    %189 = vector.shape_cast %188 : vector<128xf32> to vector<1x128xf32>
    %190 = tpu.concatenate %143, %157, %171, %185 in 0 : vector<1x128xi32>, vector<1x128xi32>, vector<1x128xi32>, vector<1x128xi32> -> vector<4x128xi32>
    %191 = tpu.concatenate %147, %161, %175, %189 in 0 : vector<1x128xf32>, vector<1x128xf32>, vector<1x128xf32>, vector<1x128xf32> -> vector<4x128xf32>
    %cst_58 = arith.constant dense<0.000000e+00> : vector<128xf32>
    %192 = vector.multi_reduction <add>, %191, %cst_58 [0] : vector<4x128xf32> to vector<128xf32>
    %193 = vector.shape_cast %192 : vector<128xf32> to vector<1x128xf32>
    %cst_59 = arith.constant 9.99999968E-21 : f32
    %194 = vector.broadcast %cst_59 : f32 to vector<1x128xf32>
    %195 = arith.addf %193, %194 : vector<1x128xf32>
    %196 = vector.broadcast %195 : vector<1x128xf32> to vector<4x128xf32>
    %197 = arith.divf %191, %196 : vector<4x128xf32>
    %cst_60 = arith.constant 2.500000e+00 : f32
    %198 = vector.broadcast %cst_60 : f32 to vector<4x128xf32>
    %199 = arith.mulf %197, %198 : vector<4x128xf32>
    %c0_61 = arith.constant 0 : index
    %c0_62 = arith.constant 0 : index
    %200 = vector.load %arg4[%c0_61, %c0_62] : memref<4x128xi32, #tpu.memory_space<vmem>>, vector<4x128xi32>
    tpu.vector_store %arg4[%c0_61, %c0_62], %190 {strides = array<i32>} : memref<4x128xi32, #tpu.memory_space<vmem>>, vector<4x128xi32>,
    %c0_63 = arith.constant 0 : index
    %c0_64 = arith.constant 0 : index
    %201 = vector.load %arg5[%c0_63, %c0_64] : memref<4x128xf32, #tpu.memory_space<vmem>>, vector<4x128xf32>
    tpu.vector_store %arg5[%c0_63, %c0_64], %199 {strides = array<i32>} : memref<4x128xf32, #tpu.memory_space<vmem>>, vector<4x128xf32>,
    return
  }
  func.func @transform_0(%arg0: i32) -> (i32, i32) {
    %c0_i32 = arith.constant 0 : i32
    %c0_i32_0 = arith.constant 0 : i32
    return %arg0, %c0_i32 : i32, i32
  }
  func.func @transform_1(%arg0: i32) -> (i32, i32) {
    %c0_i32 = arith.constant 0 : i32
    %c0_i32_0 = arith.constant 0 : i32
    %c0_i32_1 = arith.constant 0 : i32
    return %c0_i32, %c0_i32_0 : i32, i32
  }
  func.func @transform_2(%arg0: i32) -> (i32, i32) {
    %c0_i32 = arith.constant 0 : i32
    %c0_i32_0 = arith.constant 0 : i32
    %c0_i32_1 = arith.constant 0 : i32
    return %c0_i32, %c0_i32_0 : i32, i32
  }
  func.func @transform_3(%arg0: i32) -> (i32, i32) {
    %c0_i32 = arith.constant 0 : i32
    %c0_i32_0 = arith.constant 0 : i32
    return %c0_i32, %arg0 : i32, i32
  }
  func.func @transform_4(%arg0: i32) -> (i32, i32) {
    %c0_i32 = arith.constant 0 : i32
    %c0_i32_0 = arith.constant 0 : i32
    return %c0_i32, %arg0 : i32, i32
  }
}

</mosaic_0001>

<llo_original>
// kernel: tpu_custom_call.1
$region0: #{tpu_custom_call.1}
  #allocation0 [shape = 'u32[]', space=smem, size = 0x4, offset = 0x4, fixed_abs, tag = 'smem constant byte address 0x4 - core index']
  #allocation1 [shape = 'u32[144,128]{1,0:T(1,128)}', space=vmem, size = 0x12000, scoped, tag = 'internal scratch']
  %s0 = inlined_call_operand.vmem [shape: bf16[128,64], index: 0, kind: input, shape index: {}]
  %s1 = inlined_call_operand.vmem [shape: bf16[16,64], index: 1, kind: input, shape index: {}]
  %s2 = inlined_call_operand.vmem [shape: f32[16,1], index: 2, kind: input, shape index: {}]
  %s3 = inlined_call_operand.hbm [shape: s32[4,128], index: 3, kind: output, shape index: {0}]
  %s4 = inlined_call_operand.hbm [shape: f32[4,128], index: 4, kind: output, shape index: {1}]
  %5 = xla_tuple %s3, %s4
  %s6 = sld [smem:[#allocation0]]
  $region30: #{tpu_custom_call.1} parent=0
    _
  %s8 = ssub.s32 1, %s6
  %s9 = scalar_select 0, %s8, %s6
  $region1: #{tpu_custom_call.1} parent=0
    #allocation2 [shape = 'u8[2048]{0}', space=vmem, size = 0x800, scoped, tag = 'output window, operand 0, single buffered']
    #allocation3 [shape = 's32[1]{0}', space=sflag, size = 0x4, scoped, tag = 'scoped memory for tpu_custom_call.1']
    #allocation4 [shape = 'u8[2048]{0}', space=vmem, size = 0x800, scoped, tag = 'output window, operand 1, single buffered']
    #allocation5 [shape = 's32[1]{0}', space=sflag, size = 0x4, scoped, tag = 'scoped memory for tpu_custom_call.1']
    %10 = vsyncpa [#allocation3], 0
    %11 = vsyncpa [#allocation5], 0
    // Predicated region
    $region2: #{tpu_custom_call.1} parent=1 // pred_check
      _
    $region3: #{tpu_custom_call.1} parent=1 // pred_check_branch
      %13 = sbr.rel (0) target = $region5
    $region4: #{tpu_custom_call.1} parent=1 // pred_region
      _
    $region5: #{tpu_custom_call.1} parent=1 // pred_fallthru
      _
    // Predicated region
    $region6: #{tpu_custom_call.1} parent=1 // pred_check
      _
    $region7: #{tpu_custom_call.1} parent=1 // pred_check_branch
      %15 = sbr.rel (0) target = $region9
    $region8: #{tpu_custom_call.1} parent=1 // pred_region
      _
    $region9: #{tpu_custom_call.1} parent=1 // pred_fallthru
      _
    // Predicated region
    $region10: #{tpu_custom_call.1} parent=1 // pred_check
      _
    $region11: #{tpu_custom_call.1} parent=1 // pred_check_branch
      %17 = sbr.rel (0) target = $region13
    $region12: #{tpu_custom_call.1} parent=1 // pred_region
      _
    $region13: #{tpu_custom_call.1} parent=1 // pred_fallthru
      _
    %v19 = vld [vmem:[%s1] sm:$0xf]
    %v20 = vld [vmem:[%s1 + $0x4] sm:$0xf]
    %v21 = vld [vmem:[%s0] sm:$0xf]
    %v22 = vld [vmem:[%s0 + $0x4] sm:$0xf]
    %v23 = vld [vmem:[%s0 + $0x8] sm:$0xf]
    %v24 = vld [vmem:[%s0 + $0xc] sm:$0xf]
    %v25 = vld [vmem:[%s0 + $0x10] sm:$0xf]
    %v26 = vld [vmem:[%s0 + $0x14] sm:$0xf]
    %v27 = vld [vmem:[%s0 + $0x18] sm:$0xf]
    %v28 = vld [vmem:[%s0 + $0x1c] sm:$0xf]
    %v29 = vld [vmem:[%s0 + $0x20] sm:$0xf]
    %v30 = vld [vmem:[%s0 + $0x24] sm:$0xf]
    %v31 = vld [vmem:[%s0 + $0x28] sm:$0xf]
    %v32 = vld [vmem:[%s0 + $0x2c] sm:$0xf]
    %v33 = vld [vmem:[%s0 + $0x30] sm:$0xf]
    %v34 = vld [vmem:[%s0 + $0x34] sm:$0xf]
    %v35 = vld [vmem:[%s0 + $0x38] sm:$0xf]
    %v36 = vld [vmem:[%s0 + $0x3c] sm:$0xf]
    %v39 = vunpack.c.l.b16 %v19
    %v40 = vunpack.c.l.b16 %v20
    %v41 = vpack.c.b16 %v40, %v39
    %v58 = vunpack.c.l.b16 %v21
    %v59 = vunpack.c.l.b16 %v22
    %v60 = vunpack.c.l.b16 %v23
    %v61 = vunpack.c.l.b16 %v24
    %v62 = vunpack.c.l.b16 %v25
    %v63 = vunpack.c.l.b16 %v26
    %v64 = vunpack.c.l.b16 %v27
    %v65 = vunpack.c.l.b16 %v28
    %v66 = vunpack.c.l.b16 %v29
    %v67 = vunpack.c.l.b16 %v30
    %v68 = vunpack.c.l.b16 %v31
    %v69 = vunpack.c.l.b16 %v32
    %v70 = vunpack.c.l.b16 %v33
    %v71 = vunpack.c.l.b16 %v34
    %v72 = vunpack.c.l.b16 %v35
    %v73 = vunpack.c.l.b16 %v36
    %v74 = vpack.c.b16 %v59, %v58
    %v75 = vpack.c.b16 %v61, %v60
    %v76 = vpack.c.b16 %v63, %v62
    %v77 = vpack.c.b16 %v65, %v64
    %v78 = vpack.c.b16 %v67, %v66
    %v79 = vpack.c.b16 %v69, %v68
    %v80 = vpack.c.b16 %v71, %v70
    %v81 = vpack.c.b16 %v73, %v72
    %vm82 = vcmask 523264
    %v84 = vsel %vm82, %v41, 0
    %v87 = vsel %vm82, %v74, 0
    %v90 = vsel %vm82, %v75, 0
    %v93 = vsel %vm82, %v76, 0
    %v96 = vsel %vm82, %v77, 0
    %v99 = vsel %vm82, %v78, 0
    %v102 = vsel %vm82, %v79, 0
    %v105 = vsel %vm82, %v80, 0
    %v108 = vsel %vm82, %v81, 0
    %110 = vmatprep.subr.bf16.mxu0 0
    %111 = vmatpush1.bf16.xpose.msra.mxu0 %v108
    %112 = vmatprep.subr.bf16.mxu0 0
    %113 = vmatpush1.bf16.xpose.msra.mxu0 %v105
    %114 = vmatprep.subr.bf16.mxu0 0
    %115 = vmatpush1.bf16.xpose.msra.mxu0 %v102
    %116 = vmatprep.subr.bf16.mxu0 0
    %117 = vmatpush1.bf16.xpose.msra.mxu0 %v99
    %118 = vmatprep.subr.bf16.mxu0 0
    %119 = vmatpush1.bf16.xpose.msra.mxu0 %v96
    %120 = vmatprep.subr.bf16.mxu0 0
    %121 = vmatpush1.bf16.xpose.msra.mxu0 %v93
    %122 = vmatprep.subr.bf16.mxu0 0
    %123 = vmatpush1.bf16.xpose.msra.mxu0 %v90
    %124 = vmatprep.subr.bf16.mxu0 0
    %125 = vmatpush1.bf16.xpose.msra.mxu0 %v87
    %126 = vmatprep.subr.bf16.mxu0 0
    %127 = vmatpush2.bf16.xpose.msra.mxu0 0
    %128 = vmatprep.subr.bf16.mxu0 0
    %129 = vmatpush2.bf16.xpose.msra.mxu0 0
    %130 = vmatprep.subr.bf16.mxu0 0
    %131 = vmatpush2.bf16.xpose.msra.mxu0 0
    %132 = vmatprep.subr.bf16.mxu0 0
    %133 = vmatpush2.bf16.xpose.msra.mxu0 0
    %134 = vmatprep.subr.bf16.mxu0 0
    %135 = vmatpush2.bf16.xpose.msra.mxu0 0
    %136 = vmatprep.subr.bf16.mxu0 0
    %137 = vmatpush2.bf16.xpose.msra.mxu0 0
    %138 = vmatprep.subr.bf16.mxu0 0
    %139 = vmatpush2.bf16.xpose.msra.mxu0 0
    %140 = vmatprep.subr.bf16.mxu0 0
    %141 = vmatpush2.bf16.xpose.msra.mxu0 0
    %142 = vmatprep.mubr.bf16.mxu0 0
    %143 = vmatmul.mubr.bf16.gmra.mxu0 %v84
    %v144 = vpop.f32.mrf.mxu0
    %v145 = vadd.f32 0.0, %v144
    %v146 = vpop.f32.mrf.mxu0
    %v147 = vpop.f32.mrf.mxu0
    %v148 = vadd.f32 0.0, %v147
    %v149 = vpop.f32.mrf.mxu0
    %150 = vdwg.mxu0
    %v151 = vxor.u32 %v145, 2147483648
    %v152 = vxor.u32 %v148, 2147483648
    %v153 = vmul.f32 %v151, 1.442695
    %v154 = vpow.pop %v153
    %v155 = vmul.f32 %v152, 1.442695
    %v156 = vpow.pop %v155
    %v157 = vadd.f32 %v154, 1.0
    %v158 = vadd.f32 %v156, 1.0
    %v159 = vrcp.pop %v157
    %v160 = vmul.f32 1.0, %v159
    %v161 = vrcp.pop %v158
    %v162 = vmul.f32 1.0, %v161
    %v163 = vld [vmem:[%s2] sm:$0xff]
    %v164 = vld [vmem:[%s2 + $0x8] sm:$0xff]
    %166 = vset.pattern.permute.xlu0 0
    %167 = vperm.xlu0 %166, %v163
    %v168 = vpop.permute.xlu0 %167
    %171 = vset.pattern.permute.xlu0 0
    %172 = vperm.xlu0 %171, %v164
    %v173 = vpop.permute.xlu0 %172
    %v175 = vadd.f32 %v160, %v168
    %v176 = vadd.f32 %v162, %v173
    %v177 = vlaneseq
    %v178 = vshrl.u32 %v177, 7
    %vm179 = vcmask 1043456
    %v180 = vsel %vm179, %v175, -inf
    %v181 = vrot.slane %v180, 4
    %v182 = vmax.f32 %v180, %v181
    %v183 = vrot.slane %v182, 2
    %v184 = vmax.f32 %v182, %v183
    %v185 = vrot.slane %v184, 1
    %v186 = vmax.f32 %v184, %v185
    %vm187 = vcmp.eq.f32.partialorder %v175, %v186
    %v188 = vsel %vm187, %v178, 4
    %v189 = vsel %vm179, %v188, 2147483647
    %v190 = vrot.slane %v189, 4
    %vm191 = vcmp.lt.s32.totalorder %v189, %v190
    %v192 = vsel %vm191, %v189, %v190
    %v193 = vrot.slane %v192, 2
    %vm194 = vcmp.lt.s32.totalorder %v192, %v193
    %v195 = vsel %vm194, %v192, %v193
    %v196 = vrot.slane %v195, 1
    %vm197 = vcmp.lt.s32.totalorder %v195, %v196
    %v198 = vsel %vm197, %v195, %v196
    %vm199 = vcmp.eq.s32.totalorder %v178, %v198
    %v200 = vsel %vm199, -inf, %v175
    %v201 = vsel %vm179, %v200, -inf
    %v202 = vrot.slane %v201, 4
    %v203 = vmax.f32 %v201, %v202
    %v204 = vrot.slane %v203, 2
    %v205 = vmax.f32 %v203, %v204
    %v206 = vrot.slane %v205, 1
    %v207 = vmax.f32 %v205, %v206
    %v208 = vadd.f32 %v186, %v207
    %vm209 = vcmask 1047556
    %v210 = vsel %vm209, %v175, -inf
    %v211 = vrot.slane %v210, 4
    %v212 = vmax.f32 %v210, %v211
    %v213 = vrot.slane %v212, 2
    %v214 = vmax.f32 %v212, %v213
    %v215 = vrot.slane %v214, 1
    %v216 = vmax.f32 %v214, %v215
    %vm217 = vcmp.eq.f32.partialorder %v175, %v216
    %v218 = vrot.slane %v178, 4
    %v219 = vsel %vm217, %v218, 4
    %v220 = vsel %vm209, %v219, 2147483647
    %v221 = vrot.slane %v220, 4
    %vm222 = vcmp.lt.s32.totalorder %v220, %v221
    %v223 = vsel %vm222, %v220, %v221
    %v224 = vrot.slane %v223, 2
    %vm225 = vcmp.lt.s32.totalorder %v223, %v224
    %v226 = vsel %vm225, %v223, %v224
    %v227 = vrot.slane %v226, 1
    %vm228 = vcmp.lt.s32.totalorder %v226, %v227
    %v229 = vsel %vm228, %v226, %v227
    %vm230 = vcmp.eq.s32.totalorder %v178, %v229
    %v232 = vrot.slane %v175, 4
    %v234 = vsel %vm230, -inf, %v232
    %v235 = vsel %vm179, %v234, -inf
    %v236 = vrot.slane %v235, 4
    %v237 = vmax.f32 %v235, %v236
    %v238 = vrot.slane %v237, 2
    %v239 = vmax.f32 %v237, %v238
    %v240 = vrot.slane %v239, 1
    %v241 = vmax.f32 %v239, %v240
    %v242 = vadd.f32 %v216, %v241
    %v243 = vsel %vm179, %v176, -inf
    %v244 = vrot.slane %v243, 4
    %v245 = vmax.f32 %v243, %v244
    %v246 = vrot.slane %v245, 2
    %v247 = vmax.f32 %v245, %v246
    %v248 = vrot.slane %v247, 1
    %v249 = vmax.f32 %v247, %v248
    %vm250 = vcmp.eq.f32.partialorder %v176, %v249
    %v251 = vsel %vm250, %v178, 4
    %v252 = vsel %vm179, %v251, 2147483647
    %v253 = vrot.slane %v252, 4
    %vm254 = vcmp.lt.s32.totalorder %v252, %v253
    %v255 = vsel %vm254, %v252, %v253
    %v256 = vrot.slane %v255, 2
    %vm257 = vcmp.lt.s32.totalorder %v255, %v256
    %v258 = vsel %vm257, %v255, %v256
    %v259 = vrot.slane %v258, 1
    %vm260 = vcmp.lt.s32.totalorder %v258, %v259
    %v261 = vsel %vm260, %v258, %v259
    %vm262 = vcmp.eq.s32.totalorder %v178, %v261
    %v263 = vsel %vm262, -inf, %v176
    %v264 = vsel %vm179, %v263, -inf
    %v265 = vrot.slane %v264, 4
    %v266 = vmax.f32 %v264, %v265
    %v267 = vrot.slane %v266, 2
    %v268 = vmax.f32 %v266, %v267
    %v269 = vrot.slane %v268, 1
    %v270 = vmax.f32 %v268, %v269
    %v271 = vadd.f32 %v249, %v270
    %v272 = vsel %vm209, %v176, -inf
    %v273 = vrot.slane %v272, 4
    %v274 = vmax.f32 %v272, %v273
    %v275 = vrot.slane %v274, 2
    %v276 = vmax.f32 %v274, %v275
    %v277 = vrot.slane %v276, 1
    %v278 = vmax.f32 %v276, %v277
    %vm279 = vcmp.eq.f32.partialorder %v176, %v278
    %v280 = vsel %vm279, %v218, 4
    %v281 = vsel %vm209, %v280, 2147483647
    %v282 = vrot.slane %v281, 4
    %vm283 = vcmp.lt.s32.totalorder %v281, %v282
    %v284 = vsel %vm283, %v281, %v282
    %v285 = vrot.slane %v284, 2
    %vm286 = vcmp.lt.s32.totalorder %v284, %v285
    %v287 = vsel %vm286, %v284, %v285
    %v288 = vrot.slane %v287, 1
    %vm289 = vcmp.lt.s32.totalorder %v287, %v288
    %v290 = vsel %vm289, %v287, %v288
    %vm291 = vcmp.eq.s32.totalorder %v178, %v290
    %v293 = vrot.slane %v176, 4
    %v295 = vsel %vm291, -inf, %v293
    %v296 = vsel %vm179, %v295, -inf
    %v297 = vrot.slane %v296, 4
    %v298 = vmax.f32 %v296, %v297
    %v299 = vrot.slane %v298, 2
    %v300 = vmax.f32 %v298, %v299
    %v301 = vrot.slane %v300, 1
    %v302 = vmax.f32 %v300, %v301
    %v303 = vadd.f32 %v278, %v302
    %vm304 = vcmask 1040384
    %v305 = vsel %vm304, %v208, %v242
    %vm306 = vcmask 1041408
    %v307 = vsel %vm306, %v305, %v271
    %vm308 = vcmask 1042432
    %v309 = vsel %vm308, %v307, %v303
    %v310 = vsel %vm179, %v309, -inf
    %v311 = vrot.slane %v310, 4
    %v312 = vmax.f32 %v310, %v311
    %v313 = vrot.slane %v312, 2
    %v314 = vmax.f32 %v312, %v313
    %v315 = vrot.slane %v314, 1
    %v316 = vmax.f32 %v314, %v315
    %vm317 = vcmp.eq.f32.partialorder %v309, %v316
    %v318 = vsel %vm317, %v178, 4
    %v319 = vsel %vm179, %v318, 2147483647
    %v320 = vrot.slane %v319, 4
    %vm321 = vcmp.lt.s32.totalorder %v319, %v320
    %v322 = vsel %vm321, %v319, %v320
    %v323 = vrot.slane %v322, 2
    %vm324 = vcmp.lt.s32.totalorder %v322, %v323
    %v325 = vsel %vm324, %v322, %v323
    %v326 = vrot.slane %v325, 1
    %vm327 = vcmp.lt.s32.totalorder %v325, %v326
    %v328 = vsel %vm327, %v325, %v326
    %vm329 = vcmp.eq.s32.totalorder %v178, %v328
    %v330 = vsel %vm329, -inf, %v309
    %v331 = vsel %vm179, %v330, -inf
    %v332 = vrot.slane %v331, 4
    %v333 = vmax.f32 %v331, %v332
    %v334 = vrot.slane %v333, 2
    %v335 = vmax.f32 %v333, %v334
    %v336 = vrot.slane %v335, 1
    %v337 = vmax.f32 %v335, %v336
    %vm338 = vcmp.eq.f32.partialorder %v330, %v337
    %v339 = vsel %vm338, %v178, 4
    %v340 = vsel %vm179, %v339, 2147483647
    %v341 = vrot.slane %v340, 4
    %vm342 = vcmp.lt.s32.totalorder %v340, %v341
    %v343 = vsel %vm342, %v340, %v341
    %v344 = vrot.slane %v343, 2
    %vm345 = vcmp.lt.s32.totalorder %v343, %v344
    %v346 = vsel %vm345, %v343, %v344
    %v347 = vrot.slane %v346, 1
    %vm348 = vcmp.lt.s32.totalorder %v346, %v347
    %v349 = vsel %vm348, %v346, %v347
    %vm350 = vcmp.eq.s32.totalorder %v178, %v349
    %vm351 = vmor %vm329, %vm350
    %v352 = vsel %vm351, 1, 0
    %vm353 = vcmp.eq.s32.totalorder %v352, 1
    %v354 = vrot.slane %v175, 1
    %v355 = vrot.slane %v175, 2
    %v356 = vrot.slane %v175, 3
    %v361 = vsel %vm353, %v175, 0.0
    %v362 = vsel %vm353, %v354, 0.0
    %v363 = vsel %vm353, %v355, 0.0
    %v364 = vsel %vm353, %v356, 0.0
    %v365 = vrot.slane %v175, 5
    %v366 = vrot.slane %v175, 6
    %v369 = vsel %vm353, %v232, 0.0
    %v370 = vsel %vm353, %v365, 0.0
    %v371 = vsel %vm353, %v366, 0.0
    %v372 = vrot.slane %v176, 6
    %v373 = vrot.slane %v176, 7
    %v374 = vrot.slane %v176, 1
    %v379 = vsel %vm353, %v372, 0.0
    %v380 = vsel %vm353, %v373, 0.0
    %v381 = vsel %vm353, %v176, 0.0
    %v382 = vsel %vm353, %v374, 0.0
    %v383 = vrot.slane %v176, 2
    %v384 = vrot.slane %v176, 3
    %v387 = vsel %vm353, %v383, 0.0
    %v388 = vsel %vm353, %v384, 0.0
    %v389 = vsel %vm353, %v293, 0.0
    %v394 = vrot.slane %v362, 7
    %vm395 = vcmask 1041409
    %v396 = vsel %vm395, %v394, %v361
    %v397 = vrot.slane %v363, 6
    %vm398 = vcmask 1042434
    %v399 = vsel %vm398, %v397, %v396
    %v400 = vrot.slane %v364, 5
    %vm401 = vcmask 1043459
    %v402 = vsel %vm401, %v400, %v399
    %v407 = vrot.slane %v369, 4
    %vm408 = vcmask 1045509
    %v409 = vsel %vm408, %v407, %v400
    %v410 = vrot.slane %v370, 3
    %vm411 = vcmask 1046534
    %v412 = vsel %vm411, %v410, %v409
    %v413 = vrot.slane %v371, 2
    %vm414 = vcmask 1047559
    %v415 = vsel %vm414, %v413, %v412
    %v421 = vrot.slane %v379, 2
    %v422 = vrot.slane %v380, 1
    %v423 = vsel %vm395, %v422, %v421
    %v424 = vsel %vm398, %v381, %v423
    %v425 = vrot.slane %v382, 7
    %v426 = vsel %vm401, %v425, %v424
    %v431 = vrot.slane %v387, 6
    %v432 = vsel %vm408, %v431, %v425
    %v433 = vrot.slane %v388, 5
    %v434 = vsel %vm411, %v433, %v432
    %v435 = vrot.slane %v389, 4
    %v436 = vsel %vm414, %v435, %v434
    %v438 = vsel %vm179, %v402, %v415
    %v439 = vsel %vm179, %v426, %v436
    %v440 = vadd.s32 %v178, 8
    %v443 = vshra.s32 %v438, 31
    %v444 = vshra.s32 %v439, 31
    %v445 = vand.u32 %v443, 2147483647
    %v446 = vand.u32 %v444, 2147483647
    %v447 = vxor.u32 %v438, %v445
    %v448 = vxor.u32 %v439, %v446
    %v449 = vand.u32 %v447, 4294967280
    %v450 = vand.u32 %v448, 4294967280
    %v451 = vsub.s32 15, %v178
    %v452 = vsub.s32 15, %v440
    %v453 = vor.u32 %v449, %v451
    %v454 = vor.u32 %v450, %v452
    %vm455 = vcmp.gt.s32.totalorder %v453, %v454
    %v456 = vsel %vm455, %v453, %v454
    %v457 = vrot.slane %v456, 4
    %vm458 = vcmp.gt.s32.totalorder %v456, %v457
    %v459 = vsel %vm458, %v456, %v457
    %v460 = vrot.slane %v459, 2
    %vm461 = vcmp.gt.s32.totalorder %v459, %v460
    %v462 = vsel %vm461, %v459, %v460
    %v463 = vrot.slane %v462, 1
    %vm464 = vcmp.gt.s32.totalorder %v462, %v463
    %v465 = vsel %vm464, %v462, %v463
    %vm466 = vcmp.eq.s32.totalorder %v453, %v465
    %vm467 = vcmp.eq.s32.totalorder %v454, %v465
    %v468 = vand.u32 %v465, 15
    %v469 = vsub.s32 15, %v468
    %v470 = vsel %vm466, %v160, 0.0
    %v471 = vsel %vm467, %v162, 0.0
    %v472 = vadd.f32 %v470, %v471
    %v473 = vrot.slane %v472, 4
    %v474 = vadd.f32 %v472, %v473
    %v475 = vrot.slane %v474, 2
    %v476 = vadd.f32 %v474, %v475
    %v477 = vrot.slane %v476, 1
    %v478 = vadd.f32 %v476, %v477
    %v479 = vsel %vm466, 2147483648, %v453
    %v480 = vsel %vm467, 2147483648, %v454
    %vm481 = vcmp.gt.s32.totalorder %v479, %v480
    %v482 = vsel %vm481, %v479, %v480
    %v483 = vrot.slane %v482, 4
    %vm484 = vcmp.gt.s32.totalorder %v482, %v483
    %v485 = vsel %vm484, %v482, %v483
    %v486 = vrot.slane %v485, 2
    %vm487 = vcmp.gt.s32.totalorder %v485, %v486
    %v488 = vsel %vm487, %v485, %v486
    %v489 = vrot.slane %v488, 1
    %vm490 = vcmp.gt.s32.totalorder %v488, %v489
    %v491 = vsel %vm490, %v488, %v489
    %vm492 = vcmp.eq.s32.totalorder %v479, %v491
    %vm493 = vcmp.eq.s32.totalorder %v480, %v491
    %v494 = vand.u32 %v491, 15
    %v495 = vsub.s32 15, %v494
    %v496 = vsel %vm492, %v160, 0.0
    %v497 = vsel %vm493, %v162, 0.0
    %v498 = vadd.f32 %v496, %v497
    %v499 = vrot.slane %v498, 4
    %v500 = vadd.f32 %v498, %v499
    %v501 = vrot.slane %v500, 2
    %v502 = vadd.f32 %v500, %v501
    %v503 = vrot.slane %v502, 1
    %v504 = vadd.f32 %v502, %v503
    %v505 = vsel %vm492, 2147483648, %v479
    %v506 = vsel %vm493, 2147483648, %v480
    %vm507 = vcmp.gt.s32.totalorder %v505, %v506
    %v508 = vsel %vm507, %v505, %v506
    %v509 = vrot.slane %v508, 4
    %vm510 = vcmp.gt.s32.totalorder %v508, %v509
    %v511 = vsel %vm510, %v508, %v509
    %v512 = vrot.slane %v511, 2
    %vm513 = vcmp.gt.s32.totalorder %v511, %v512
    %v514 = vsel %vm513, %v511, %v512
    %v515 = vrot.slane %v514, 1
    %vm516 = vcmp.gt.s32.totalorder %v514, %v515
    %v517 = vsel %vm516, %v514, %v515
    %vm518 = vcmp.eq.s32.totalorder %v505, %v517
    %vm519 = vcmp.eq.s32.totalorder %v506, %v517
    %v520 = vand.u32 %v517, 15
    %v521 = vsub.s32 15, %v520
    %v522 = vsel %vm518, %v160, 0.0
    %v523 = vsel %vm519, %v162, 0.0
    %v524 = vadd.f32 %v522, %v523
    %v525 = vrot.slane %v524, 4
    %v526 = vadd.f32 %v524, %v525
    %v527 = vrot.slane %v526, 2
    %v528 = vadd.f32 %v526, %v527
    %v529 = vrot.slane %v528, 1
    %v530 = vadd.f32 %v528, %v529
    %v531 = vsel %vm518, 2147483648, %v505
    %v532 = vsel %vm519, 2147483648, %v506
    %vm533 = vcmp.gt.s32.totalorder %v531, %v532
    %v534 = vsel %vm533, %v531, %v532
    %v535 = vrot.slane %v534, 4
    %vm536 = vcmp.gt.s32.totalorder %v534, %v535
    %v537 = vsel %vm536, %v534, %v535
    %v538 = vrot.slane %v537, 2
    %vm539 = vcmp.gt.s32.totalorder %v537, %v538
    %v540 = vsel %vm539, %v537, %v538
    %v541 = vrot.slane %v540, 1
    %vm542 = vcmp.gt.s32.totalorder %v540, %v541
    %v543 = vsel %vm542, %v540, %v541
    %vm544 = vcmp.eq.s32.totalorder %v531, %v543
    %vm545 = vcmp.eq.s32.totalorder %v532, %v543
    %v546 = vand.u32 %v543, 15
    %v547 = vsub.s32 15, %v546
    %v548 = vsel %vm544, %v160, 0.0
    %v549 = vsel %vm545, %v162, 0.0
    %v550 = vadd.f32 %v548, %v549
    %v551 = vrot.slane %v550, 4
    %v552 = vadd.f32 %v550, %v551
    %v553 = vrot.slane %v552, 2
    %v554 = vadd.f32 %v552, %v553
    %v555 = vrot.slane %v554, 1
    %v556 = vadd.f32 %v554, %v555
    %v557 = vsel %vm304, %v469, %v495
    %v558 = vsel %vm306, %v557, %v521
    %v559 = vsel %vm308, %v558, %v547
    %v560 = vsel %vm304, %v478, %v504
    %v561 = vsel %vm306, %v560, %v530
    %v562 = vsel %vm308, %v561, %v556
    %v563 = vsel %vm179, %v562, 0.0
    %v564 = vrot.slane %v563, 4
    %v565 = vadd.f32 %v563, %v564
    %v566 = vrot.slane %v565, 2
    %v567 = vadd.f32 %v565, %v566
    %v568 = vrot.slane %v567, 1
    %v569 = vadd.f32 %v567, %v568
    %v570 = vadd.f32 %v569, 1e-20
    %v571 = vrcp.pop %v570
    %v572 = vmul.f32 %v562, %v571
    %v573 = vmul.f32 %v572, 2.5
    %574 = vst [vmem:[#allocation2] sm:$0xf] %v559
    %575 = vst [vmem:[#allocation4] sm:$0xf] %v573
    // Predicated region
    $region14: #{tpu_custom_call.1} parent=1 // pred_check
      _
    $region15: #{tpu_custom_call.1} parent=1 // pred_check_branch
      %577 = sbr.rel (0) target = $region17
    $region16: #{tpu_custom_call.1} parent=1 // pred_region
      %s579 = ssub.s32 64, 64
      %580 = vsyncadd [#allocation3], %s579
      %s582 = sshll.u32 [#allocation2], 4
      %s583 = int_to_ptr.vmem [resolvable:$true] %s582
      %585 = dma.vmem_to_hbm [thread:$0]  %s583, 64, %s3, [#allocation3]
    $region17: #{tpu_custom_call.1} parent=1 // pred_fallthru
      _
    // Predicated region
    $region18: #{tpu_custom_call.1} parent=1 // pred_check
      _
    $region19: #{tpu_custom_call.1} parent=1 // pred_check_branch
      %587 = sbr.rel (0) target = $region21
    $region20: #{tpu_custom_call.1} parent=1 // pred_region
      %s589 = ssub.s32 64, 64
      %590 = vsyncadd [#allocation5], %s589
      %s592 = sshll.u32 [#allocation4], 4
      %s593 = int_to_ptr.vmem [resolvable:$true] %s592
      %595 = dma.vmem_to_hbm [thread:$0]  %s593, 64, %s4, [#allocation5]
    $region21: #{tpu_custom_call.1} parent=1 // pred_fallthru
      _
    // Predicated region
    $region22: #{tpu_custom_call.1} parent=1 // pred_check
      _
    $region23: #{tpu_custom_call.1} parent=1 // pred_check_branch
      %597 = sbr.rel (0) target = $region25
    $region24: #{tpu_custom_call.1} parent=1 // pred_region
      %598 = dma.done [#allocation3], 64
    $region25: #{tpu_custom_call.1} parent=1 // pred_fallthru
      _
    // Predicated region
    $region26: #{tpu_custom_call.1} parent=1 // pred_check
      _
    $region27: #{tpu_custom_call.1} parent=1 // pred_check_branch
      %600 = sbr.rel (0) target = $region29
    $region28: #{tpu_custom_call.1} parent=1 // pred_region
      %601 = dma.done [#allocation5], 64
    $region29: #{tpu_custom_call.1} parent=1 // pred_fallthru
      _
    %602 = vsyncpa [#allocation3], 1
    %603 = vsyncpa [#allocation5], 1

</llo_original>
